<compile_context>
chip_gen: v7x
topology: tpu7x:2x2x1
jax: 0.10.0
libtpu: 0.0.40
codegen_flags: <defaults>
</compile_context>

<pallas_src>
import functools

import jax
import jax.numpy as jnp
from jax.experimental import pallas as pl
from jax.experimental.pallas import tpu as pltpu


def _extra_tokens_kernel(relu_flags, x_ref, *rest):
    """rest = [W_0..W_{L-1}, b_0..b_{L-1}, out_ref] (fused block-diagonal params)."""
    o_ref = rest[-1]
    p_refs = rest[:-1]
    nl = len(p_refs) // 2
    w_refs = p_refs[:nl]
    b_refs = p_refs[nl:]

    h = x_ref[...]
    for l in range(nl):                       # static Python unroll (L <= a few)
        h = jnp.dot(h, w_refs[l][...],
                    preferred_element_type=jnp.float32) + b_refs[l][...]
        if relu_flags[l]:
            h = jnp.maximum(h, 0.0)
    o_ref[...] = h.astype(o_ref.dtype)


def _init_linear(key, d_in, d_out):
    # PyTorch nn.Linear default init: U(-1/sqrt(d_in), 1/sqrt(d_in)).
    kw, kb = jax.random.split(key)
    bound = 1.0 / (d_in ** 0.5)
    w = jax.random.uniform(kw, (d_in, d_out), jnp.float32, -bound, bound)
    b = jax.random.uniform(kb, (1, d_out), jnp.float32, -bound, bound)
    return w, b


def build_params(key, mod_dims, extra_num_layers, extra_hidden_size,
                 extra_embedding_size):
    """Per-modality MLP params (weights stored (D_in, D_out)), mirroring __init__."""
    params = []
    relu_flags = []
    for d in mod_dims:
        if extra_num_layers > 0:
            dims = ([d, extra_hidden_size]
                    + [extra_hidden_size] * (extra_num_layers - 1)
                    + [extra_embedding_size])
            flags = [False] + [True] * (extra_num_layers - 1) + [False]
        else:
            dims = [d, extra_embedding_size]
            flags = [False]
        layers = []
        for i in range(len(dims) - 1):
            key, sub = jax.random.split(key)
            layers.append(_init_linear(sub, dims[i], dims[i + 1]))
        params.append(layers)
        relu_flags.append(tuple(flags))
    return params, tuple(relu_flags)


def fuse_params(params, relu_flags):
    """Build one block-diagonal weight + concatenated bias per layer.

    All modalities share the same layer structure (same hidden width / ReLU
    pattern), so fusing along the feature axis is exact.
    """
    n_mod = len(params)
    n_layers = len(params[0])
    assert all(len(p) == n_layers for p in params)
    assert all(f == relu_flags[0] for f in relu_flags)

    fused_ws, fused_bs = [], []
    for l in range(n_layers):
        ws = [params[m][l][0] for m in range(n_mod)]
        bs = [params[m][l][1] for m in range(n_mod)]
        d_in = sum(w.shape[0] for w in ws)
        d_out = sum(w.shape[1] for w in ws)
        W = jnp.zeros((d_in, d_out), jnp.float32)
        ri = ci = 0
        for w in ws:
            W = W.at[ri:ri + w.shape[0], ci:ci + w.shape[1]].set(w)
            ri += w.shape[0]
            ci += w.shape[1]
        fused_ws.append(W)
        fused_bs.append(jnp.concatenate(bs, axis=-1))
    return fused_ws, fused_bs, tuple(relu_flags[0])


def extra_modality_tokens(obs_list, fused_ws, fused_bs, relu_flags, *,
                          tm=512, out_dtype=jnp.float32):
    """obs_list: list of (B, T, D_m) arrays (modality order). -> (B, T, M, E)."""
    n_mod = len(obs_list)
    B, T, _ = obs_list[0].shape
    bt = B * T

    # Concatenate modalities along lanes: (B*T, sum(D_m)).
    x = jnp.concatenate(
        [o.astype(jnp.float32).reshape(bt, o.shape[-1]) for o in obs_list],
        axis=-1)
    d_in = x.shape[-1]
    d_out = fused_ws[-1].shape[-1]            # n_mod * E

    # Large lane-dense row tile; cap at problem size, keep sublane alignment.
    if bt <= tm:
        tm_eff = bt                           # block == full row extent
    else:
        tm_eff = max(8, (tm // 8) * 8)
    grid = (pl.cdiv(bt, tm_eff),)

    flat_params = list(fused_ws) + list(fused_bs)
    in_specs = ([pl.BlockSpec((tm_eff, d_in), lambda i: (i, 0))]
                + [pl.BlockSpec(p.shape, lambda i: (0, 0)) for p in flat_params])
    out_spec = pl.BlockSpec((tm_eff, d_out), lambda i: (i, 0))

    out = pl.pallas_call(
        functools.partial(_extra_tokens_kernel, relu_flags),
        out_shape=jax.ShapeDtypeStruct((bt, d_out), out_dtype),
        grid_spec=pltpu.PrefetchScalarGridSpec(
            num_scalar_prefetch=0,
            grid=grid,
            in_specs=in_specs,
            out_specs=out_spec,
        ),
        compiler_params=pltpu.CompilerParams(
            dimension_semantics=("parallel",)),
    )(x, *flat_params)

    E = d_out // n_mod
    # Free view: row-major (B*T, M*E) == (B, T, M, E) == torch.stack(..., dim=-2).
    return out.reshape(B, T, n_mod, E)


def _reference(obs_list, params, relu_flags):
    """Pure-JAX reference of the PyTorch forward() (per-modality, unfused)."""
    toks = []
    for x, layers, flags in zip(obs_list, params, relu_flags):
        h = x.astype(jnp.float32)
        for (w, b), f in zip(layers, flags):
            h = h @ w + b
            if f:
                h = jnp.maximum(h, 0.0)
        toks.append(h)
    return jnp.stack(toks, axis=-2)           # (B, T, M, E)


def _run_case(key, B, T, extra_num_layers, extra_hidden_size,
              extra_embedding_size, tm, atol):
    mod_dims = (7, 2, 3)                      # joint_states, gripper_states, ee_states
    kj, kg, ke, kp = jax.random.split(key, 4)
    obs_list = [
        jax.random.normal(kj, (B, T, mod_dims[0]), jnp.float32),
        jax.random.normal(kg, (B, T, mod_dims[1]), jnp.float32),
        jax.random.normal(ke, (B, T, mod_dims[2]), jnp.float32),
    ]
    params, relu_flags = build_params(kp, mod_dims, extra_num_layers,
                                      extra_hidden_size, extra_embedding_size)
    fused_ws, fused_bs, fused_flags = fuse_params(params, relu_flags)

    out = extra_modality_tokens(obs_list, fused_ws, fused_bs, fused_flags, tm=tm)
    out = jax.block_until_ready(out)

    ref = _reference(obs_list, params, relu_flags)
    assert out.shape == (B, T, len(mod_dims), extra_embedding_size), out.shape
    err = float(jnp.max(jnp.abs(out - ref)))
    assert jnp.allclose(out, ref, atol=atol, rtol=atol), err


if __name__ == "__main__":
    key = jax.random.PRNGKey(0)
    k1, k2 = jax.random.split(key)

    # Case 1: module defaults, all modalities on (extra_num_layers=0 ->
    # one Linear(D_m -> 32) per modality); B*T fits a single block.
    _run_case(k1, B=2, T=8, extra_num_layers=0, extra_hidden_size=64,
              extra_embedding_size=32, tm=512, atol=1e-5)

    # Case 2: deeper MLP (Linear / Linear+ReLU / Linear) and a row count that
    # exercises multiple grid steps plus a partial tail block (no padding).
    _run_case(k2, B=3, T=25, extra_num_layers=2, extra_hidden_size=64,
              extra_embedding_size=32, tm=32, atol=5e-5)

    print("KERNEL_OK")
</pallas_src>

<mosaic_0001>
module attributes {stable_mosaic.version = 11 : i64} {
  func.func @_extra_tokens_kernel(%arg0: i32, %arg1: memref<16x12xf32, #tpu.memory_space<vmem>>, %arg2: memref<12x96xf32, #tpu.memory_space<vmem>>, %arg3: memref<1x96xf32, #tpu.memory_space<vmem>>, %arg4: memref<16x96xf32, #tpu.memory_space<vmem>>) attributes {dimension_semantics = [#tpu.dimension_semantics<parallel>], iteration_bounds = array<i64: 1>, scalar_prefetch = 0 : i64, scratch_operands = 0 : i64, tpu.core_type = #tpu.core_type<tc>, window_params = [{transform_indices = @transform_0, window_bounds = array<i64: 16, 12>}, {pipeline_mode = #tpu.pipeline_mode<synchronous>, transform_indices = @transform_1, window_bounds = array<i64: 12, 96>}, {pipeline_mode = #tpu.pipeline_mode<synchronous>, transform_indices = @transform_2, window_bounds = array<i64: 1, 96>}, {transform_indices = @transform_3, window_bounds = array<i64: 16, 96>}]} {
    %c0 = arith.constant 0 : index
    %c0_0 = arith.constant 0 : index
    %0 = vector.load %arg1[%c0, %c0_0] : memref<16x12xf32, #tpu.memory_space<vmem>>, vector<16x12xf32>
    %c0_1 = arith.constant 0 : index
    %c0_2 = arith.constant 0 : index
    %1 = vector.load %arg2[%c0_1, %c0_2] : memref<12x96xf32, #tpu.memory_space<vmem>>, vector<12x96xf32>
    %cst = arith.constant dense<0.000000e+00> : vector<16x96xf32>
    %2 = tpu.matmul %0, %1, %cst {dimension_numbers = #tpu.dot_dimension_numbers<[1], [0], [0], [1], [0, 0, 1, 1], [], []>} : vector<16x12xf32>, vector<12x96xf32>, vector<16x96xf32> -> vector<16x96xf32>
    %c0_3 = arith.constant 0 : index
    %c0_4 = arith.constant 0 : index
    %3 = vector.load %arg3[%c0_3, %c0_4] : memref<1x96xf32, #tpu.memory_space<vmem>>, vector<1x96xf32>
    %4 = vector.broadcast %3 : vector<1x96xf32> to vector<16x96xf32>
    %5 = arith.addf %2, %4 : vector<16x96xf32>
    %c0_5 = arith.constant 0 : index
    %c0_6 = arith.constant 0 : index
    %6 = vector.load %arg4[%c0_5, %c0_6] : memref<16x96xf32, #tpu.memory_space<vmem>>, vector<16x96xf32>
    tpu.vector_store %arg4[%c0_5, %c0_6], %5 {strides = array<i32>} : memref<16x96xf32, #tpu.memory_space<vmem>>, vector<16x96xf32>,
    return
  }
  func.func @transform_0(%arg0: i32) -> (i32, i32) {
    %c0_i32 = arith.constant 0 : i32
    %c0_i32_0 = arith.constant 0 : i32
    return %arg0, %c0_i32 : i32, i32
  }
  func.func @transform_1(%arg0: i32) -> (i32, i32) {
    %c0_i32 = arith.constant 0 : i32
    %c0_i32_0 = arith.constant 0 : i32
    %c0_i32_1 = arith.constant 0 : i32
    return %c0_i32, %c0_i32_0 : i32, i32
  }
  func.func @transform_2(%arg0: i32) -> (i32, i32) {
    %c0_i32 = arith.constant 0 : i32
    %c0_i32_0 = arith.constant 0 : i32
    %c0_i32_1 = arith.constant 0 : i32
    return %c0_i32, %c0_i32_0 : i32, i32
  }
  func.func @transform_3(%arg0: i32) -> (i32, i32) {
    %c0_i32 = arith.constant 0 : i32
    %c0_i32_0 = arith.constant 0 : i32
    return %arg0, %c0_i32 : i32, i32
  }
}

</mosaic_0001>

<llo_original>
// kernel: tpu_custom_call.1
$region0: #{tpu_custom_call.1}
  #allocation0 [shape = 'u32[]', space=smem, size = 0x4, offset = 0x4, fixed_abs, tag = 'smem constant byte address 0x4 - core index']
  #allocation1 [shape = 'u32[144,128]{1,0:T(1,128)}', space=vmem, size = 0x12000, scoped, tag = 'internal scratch']
  %s0 = inlined_call_operand.hbm [shape: f32[16,12], index: 0, kind: input, shape index: {}]
  %s1 = inlined_call_operand.hbm [shape: f32[12,96], index: 1, kind: input, shape index: {}]
  %s2 = inlined_call_operand.vmem [shape: f32[1,96], index: 2, kind: input, shape index: {}]
  %s3 = inlined_call_operand.hbm [shape: f32[16,96], index: 3, kind: output, shape index: {}]
  %s4 = sld [smem:[#allocation0]]
  $region30: #{tpu_custom_call.1} parent=0
    _
  %s6 = ssub.s32 1, %s4
  %s7 = scalar_select 0, %s6, %s4
  $region1: #{tpu_custom_call.1} parent=0
    #allocation2 [shape = 'u8[8192]{0}', space=vmem, size = 0x2000, scoped, tag = 'input window, operand 0, single buffered']
    #allocation3 [shape = 's32[1]{0}', space=sflag, size = 0x4, scoped, tag = 'scoped memory for tpu_custom_call.1']
    #allocation4 [shape = 's32[1]{0}', space=sflag, size = 0x4, scoped, tag = 'scoped memory for tpu_custom_call.1']
    #allocation5 [shape = 'u8[8192]{0}', space=vmem, size = 0x2000, scoped, tag = 'input window, operand 1, single buffered']
    #allocation6 [shape = 's32[1]{0}', space=sflag, size = 0x4, scoped, tag = 'scoped memory for tpu_custom_call.1']
    #allocation7 [shape = 'u8[8192]{0}', space=vmem, size = 0x2000, scoped, tag = 'output window, operand 0, single buffered']
    %8 = vsyncpa [#allocation3], 0
    %9 = vsyncpa [#allocation6], 0
    %10 = vsyncpa [#allocation4], 0
    // Predicated region
    $region2: #{tpu_custom_call.1} parent=1 // pred_check
      _
    $region3: #{tpu_custom_call.1} parent=1 // pred_check_branch
      %12 = sbr.rel (0) target = $region5
    $region4: #{tpu_custom_call.1} parent=1 // pred_region
      %s14 = ssub.s32 256, 256
      %15 = vsyncadd [#allocation3], %s14
      %s16 = sshll.u32 [#allocation2], 4
      %s17 = int_to_ptr.vmem [resolvable:$true] %s16
      %22 = dma.hbm_to_vmem [thread:$0]  %s0, 256, %s17, [#allocation3], 128, 128, 8
    $region5: #{tpu_custom_call.1} parent=1 // pred_fallthru
      _
    // Predicated region
    $region6: #{tpu_custom_call.1} parent=1 // pred_check
      _
    $region7: #{tpu_custom_call.1} parent=1 // pred_check_branch
      %24 = sbr.rel (0) target = $region9
    $region8: #{tpu_custom_call.1} parent=1 // pred_region
      %s26 = ssub.s32 256, 256
      %27 = vsyncadd [#allocation6], %s26
      %s28 = sshll.u32 [#allocation5], 4
      %s29 = int_to_ptr.vmem [resolvable:$true] %s28
      %34 = dma.hbm_to_vmem [thread:$0]  %s1, 256, %s29, [#allocation6], 128, 128, 8
    $region9: #{tpu_custom_call.1} parent=1 // pred_fallthru
      _
    // Predicated region
    $region10: #{tpu_custom_call.1} parent=1 // pred_check
      _
    $region11: #{tpu_custom_call.1} parent=1 // pred_check_branch
      %36 = sbr.rel (0) target = $region13
    $region12: #{tpu_custom_call.1} parent=1 // pred_region
      _
    $region13: #{tpu_custom_call.1} parent=1 // pred_fallthru
      _
    // Predicated region
    $region14: #{tpu_custom_call.1} parent=1 // pred_check
      _
    $region15: #{tpu_custom_call.1} parent=1 // pred_check_branch
      %38 = sbr.rel (0) target = $region17
    $region16: #{tpu_custom_call.1} parent=1 // pred_region
      %39 = dma.done [#allocation3], 256
    $region17: #{tpu_custom_call.1} parent=1 // pred_fallthru
      _
    // Predicated region
    $region18: #{tpu_custom_call.1} parent=1 // pred_check
      _
    $region19: #{tpu_custom_call.1} parent=1 // pred_check_branch
      %41 = sbr.rel (0) target = $region21
    $region20: #{tpu_custom_call.1} parent=1 // pred_region
      %42 = dma.done [#allocation6], 256
    $region21: #{tpu_custom_call.1} parent=1 // pred_fallthru
      _
    %v43 = vld [vmem:[#allocation2] sm:$0xff]
    %v44 = vld [vmem:[#allocation2 + $0x8] sm:$0xff]
    %v45 = vld [vmem:[#allocation5] sm:$0xff]
    %v46 = vld [vmem:[#allocation5 + $0x8] sm:$0xf]
    %v47 = vld [vmem:[%s2] sm:$0x1]
    %v49 = vlaneseq
    %v50 = vshrl.u32 %v49, 7
    %v51 = vsub.s32 0, %v50
    %v52 = vrot.slane %v47, %v51
    %vm54 = vcmask 97280
    %v56 = vsel %vm54, %v43, 0
    %v59 = vsel %vm54, %v44, 0
    %vm61 = vcmask 1043456
    %v63 = vsel %vm61, %v46, 0
    %65 = vmatprep.subr.mxu0 0.0
    %66 = vmatpush1.msra.mxu0 %v45
    %67 = vmatprep.subr.mxu0 0.0
    %68 = vmatpush1.msra.mxu0 %v63
    %69 = vmatprep.subr.mxu0 0.0
    %70 = vmatpush1.msra.mxu0 0.0
    %71 = vmatprep.subr.mxu0 0.0
    %72 = vmatpush1.msra.mxu0 0.0
    %73 = vmatprep.subr.mxu0 0.0
    %74 = vmatpush1.msra.mxu0 0.0
    %75 = vmatprep.subr.mxu0 0.0
    %76 = vmatpush1.msra.mxu0 0.0
    %77 = vmatprep.subr.mxu0 0.0
    %78 = vmatpush1.msra.mxu0 0.0
    %79 = vmatprep.subr.mxu0 0.0
    %80 = vmatpush1.msra.mxu0 0.0
    %81 = vmatprep.subr.mxu0 0.0
    %82 = vmatpush1.msra.mxu0 0.0
    %83 = vmatprep.subr.mxu0 0.0
    %84 = vmatpush1.msra.mxu0 0.0
    %85 = vmatprep.subr.mxu0 0.0
    %86 = vmatpush1.msra.mxu0 0.0
    %87 = vmatprep.subr.mxu0 0.0
    %88 = vmatpush1.msra.mxu0 0.0
    %89 = vmatprep.subr.mxu0 0.0
    %90 = vmatpush1.msra.mxu0 0.0
    %91 = vmatprep.subr.mxu0 0.0
    %92 = vmatpush1.msra.mxu0 0.0
    %93 = vmatprep.subr.mxu0 0.0
    %94 = vmatpush1.msra.mxu0 0.0
    %95 = vmatprep.subr.mxu0 0.0
    %96 = vmatpush1.msra.mxu0 0.0
    %97 = vmatprep.subr.mxu0 0.0
    %98 = vmatpush1.msra.mxu0 0.0
    %99 = vmatprep.subr.mxu0 0.0
    %100 = vmatpush1.msra.mxu0 0.0
    %101 = vmatprep.subr.mxu0 0.0
    %102 = vmatpush1.msra.mxu0 0.0
    %103 = vmatprep.subr.mxu0 0.0
    %104 = vmatpush1.msra.mxu0 0.0
    %105 = vmatprep.subr.mxu0 0.0
    %106 = vmatpush1.msra.mxu0 0.0
    %107 = vmatprep.subr.mxu0 0.0
    %108 = vmatpush1.msra.mxu0 0.0
    %109 = vmatprep.subr.mxu0 0.0
    %110 = vmatpush1.msra.mxu0 0.0
    %111 = vmatprep.subr.mxu0 0.0
    %112 = vmatpush1.msra.mxu0 0.0
    %113 = vmatprep.subr.mxu0 0.0
    %114 = vmatpush1.msra.mxu0 0.0
    %115 = vmatprep.subr.mxu0 0.0
    %116 = vmatpush1.msra.mxu0 0.0
    %117 = vmatprep.subr.mxu0 0.0
    %118 = vmatpush1.msra.mxu0 0.0
    %119 = vmatprep.subr.mxu0 0.0
    %120 = vmatpush1.msra.mxu0 0.0
    %121 = vmatprep.subr.mxu0 0.0
    %122 = vmatpush1.msra.mxu0 0.0
    %123 = vmatprep.subr.mxu0 0.0
    %124 = vmatpush1.msra.mxu0 0.0
    %125 = vmatprep.subr.mxu0 0.0
    %126 = vmatpush1.msra.mxu0 0.0
    %127 = vmatprep.subr.mxu0 0.0
    %128 = vmatpush1.msra.mxu0 0.0
    %129 = vmatprep.mubr.f32.mxu0 0.0
    %130 = vmatmul.mubr.f32.gmra.mrb[0].mxu0 %v56
    %v131 = vpop.f32.mrb[0].mxu0
    %v132 = vadd.f32 %v52, %v131
    %v133 = vpop.f32.mrb[0].mxu0
    %134 = vmatprep.mubr.f32.mxu0 0.0
    %135 = vmatmul.mubr.f32.gmra.mrb[0].mxu0 %v59
    %v136 = vpop.f32.mrb[0].mxu0
    %v137 = vadd.f32 %v52, %v136
    %v138 = vpop.f32.mrb[0].mxu0
    %139 = vdwg.mxu0
    %vm140 = vcmask 785408
    %141 = vst.msk [vmem:[#allocation7] sm:$0xff] %vm140, %v132
    %142 = vst.msk [vmem:[#allocation7 + $0x8] sm:$0xff] %vm140, %v137
    // Predicated region
    $region22: #{tpu_custom_call.1} parent=1 // pred_check
      _
    $region23: #{tpu_custom_call.1} parent=1 // pred_check_branch
      %144 = sbr.rel (0) target = $region25
    $region24: #{tpu_custom_call.1} parent=1 // pred_region
      %s146 = ssub.s32 256, 256
      %147 = vsyncadd [#allocation4], %s146
      %s148 = sshll.u32 [#allocation7], 4
      %s149 = int_to_ptr.vmem [resolvable:$true] %s148
      %154 = dma.vmem_to_hbm [thread:$0]  %s149, 256, %s3, [#allocation4], 128, 128, 8
    $region25: #{tpu_custom_call.1} parent=1 // pred_fallthru
      _
    // Predicated region
    $region26: #{tpu_custom_call.1} parent=1 // pred_check
      _
    $region27: #{tpu_custom_call.1} parent=1 // pred_check_branch
      %156 = sbr.rel (0) target = $region29
    $region28: #{tpu_custom_call.1} parent=1 // pred_region
      %157 = dma.done [#allocation4], 256
    $region29: #{tpu_custom_call.1} parent=1 // pred_fallthru
      _
    %158 = vsyncpa [#allocation3], 1
    %159 = vsyncpa [#allocation6], 1
    %160 = vsyncpa [#allocation4], 1

</llo_original>
